<compile_context>
chip_gen: v7x
topology: tpu7x:2x2x1
jax: 0.10.0
libtpu: 0.0.40
codegen_flags: <defaults>
</compile_context>

<pallas_src>
import math
from functools import partial

import numpy as np
import jax
import jax.numpy as jnp
from jax import lax
from jax.experimental import pallas as pl
from jax.experimental.pallas import tpu as pltpu


ACT_DTYPE = jnp.bfloat16                      # inter-kernel activation dtype
BN_EVAL_SCALE = 1.0 / math.sqrt(1.0 + 1e-5)   # BatchNorm2d eval with fresh running stats
SLOT_PAD = 16                                 # cross-attention Lk padded once (from 11)

_PARALLEL_1D = pltpu.CompilerParams(dimension_semantics=("parallel",))

# ----------------------------------------------------------------------------
# Cached constants
# ----------------------------------------------------------------------------

_ONEHOT_CACHE = {}


def _group_onehot(C, groups):
    """(C, G) one-hot group-assignment matrix, cached per channel count."""
    key = (C, groups)
    if key not in _ONEHOT_CACHE:
        cg = C // groups
        m = (np.arange(C)[:, None] // cg == np.arange(groups)[None, :]).astype(np.float32)
        _ONEHOT_CACHE[key] = jnp.asarray(m)
    return _ONEHOT_CACHE[key]


def _pick_hchunk(H, W, cout):
    """Largest divisor of H whose (rows x cout) f32 conv accumulator stays <= 64 KiB."""
    for hc in range(H, 0, -1):
        if H % hc == 0 and hc * W * cout * 4 <= 65536:
            return hc
    return 1


# ----------------------------------------------------------------------------
# Generic (tiny) matmul: time-embedding MLP + batched time projections
# ----------------------------------------------------------------------------

def _matmul_bias_kernel(a_ref, b_ref, bias_ref, o_ref):
    a = a_ref[...].astype(jnp.bfloat16)
    o_ref[...] = (jnp.dot(a, b_ref[...], preferred_element_type=jnp.float32)
                  + bias_ref[...]).astype(o_ref.dtype)


def pallas_matmul(a, b, bias=None, out_dtype=jnp.float32):
    """a: (M, K), b: (K, N) bf16 weights, bias: (N,) -> (M, N)."""
    M, K = a.shape
    N = b.shape[1]
    b = b.astype(jnp.bfloat16)
    bias2 = (jnp.zeros((1, N), jnp.float32) if bias is None
             else bias.astype(jnp.float32).reshape(1, N))
    return pl.pallas_call(
        _matmul_bias_kernel,
        out_shape=jax.ShapeDtypeStruct((M, N), out_dtype),
        grid=(1,),
        in_specs=[pl.BlockSpec((M, K), lambda i: (0, 0)),
                  pl.BlockSpec((K, N), lambda i: (0, 0)),
                  pl.BlockSpec((1, N), lambda i: (0, 0))],
        out_specs=pl.BlockSpec((M, N), lambda i: (0, 0)),
        compiler_params=_PARALLEL_1D,
    )(a, b, bias2)


# ----------------------------------------------------------------------------
# GroupNorm helpers / standalone GroupNorm(+Swish) kernel
# ----------------------------------------------------------------------------

def _gn_normalize_2d(x, m, gamma, beta, inv_count, eps):
    """x: (L, C) f32, m: (C, G) one-hot, gamma/beta: (1, C)  ->  normalized (L, C)."""
    s = jnp.dot(jnp.sum(x, axis=0, keepdims=True), m,
                preferred_element_type=jnp.float32)            # (1, G)
    ss = jnp.dot(jnp.sum(x * x, axis=0, keepdims=True), m,
                 preferred_element_type=jnp.float32)           # (1, G)
    mean = s * inv_count
    var = jnp.maximum(ss * inv_count - mean * mean, 0.0)
    inv_std = lax.rsqrt(var + eps)
    mean_c = jnp.dot(mean, m.T, preferred_element_type=jnp.float32)     # (1, C)
    istd_c = jnp.dot(inv_std, m.T, preferred_element_type=jnp.float32)  # (1, C)
    return (x - mean_c) * istd_c * gamma + beta


def _gn_kernel(x_ref, m_ref, gamma_ref, beta_ref, o_ref, *, inv_count, eps, apply_swish):
    x = x_ref[0].astype(jnp.float32)
    y = _gn_normalize_2d(x, m_ref[...], gamma_ref[...], beta_ref[...], inv_count, eps)
    if apply_swish:
        y = y * jax.nn.sigmoid(y)
    o_ref[0] = y.astype(o_ref.dtype)


def group_norm(x, gn, groups=32, eps=1e-5, swish=False):
    """Standalone GroupNorm(+Swish); x is (B, H, W, C) channels-last, bf16 in / bf16 out."""
    B, H, W, C = x.shape
    hw = H * W
    x3 = x.astype(ACT_DTYPE).reshape(B, hw, C)
    m = _group_onehot(C, groups)
    kern = partial(_gn_kernel, inv_count=1.0 / (hw * (C // groups)), eps=eps,
                   apply_swish=swish)
    out = pl.pallas_call(
        kern,
        out_shape=jax.ShapeDtypeStruct((B, hw, C), ACT_DTYPE),
        grid=(B,),
        in_specs=[pl.BlockSpec((1, hw, C), lambda n: (n, 0, 0)),
                  pl.BlockSpec((C, groups), lambda n: (0, 0)),
                  pl.BlockSpec((1, C), lambda n: (0, 0)),
                  pl.BlockSpec((1, C), lambda n: (0, 0))],
        out_specs=pl.BlockSpec((1, hw, C), lambda n: (n, 0, 0)),
        compiler_params=_PARALLEL_1D,
    )(x3, m, gn['gamma'].reshape(1, C), gn['beta'].reshape(1, C))
    return out.reshape(B, H, W, C)


# ----------------------------------------------------------------------------
# Fused GroupNorm(+Swish) + 3x3 conv + (temb add / residual / 1x1-shortcut) kernel
#   - pads the activation in a VMEM scratch (no HBM pad pass)
#   - tiles output rows so the f32 accumulator stays small
# ----------------------------------------------------------------------------

def _gn_conv3x3_kernel(*refs, H, W, C, cout, hchunk, inv_count, eps,
                       apply_gn, apply_swish, has_pre_vec, has_post_vec,
                       sc_mode, has_sc_w):
    it = iter(refs)
    x_ref = next(it)                          # (1, H, W, C) bf16
    if apply_gn:
        m_ref = next(it)                      # (C, G)
        gamma_ref = next(it)                  # (1, C)
        beta_ref = next(it)                   # (1, C)
    w_ref = next(it)                          # (9, C, cout) bf16
    b_ref = next(it)                          # (1, cout) f32
    pre_vec_ref = next(it) if has_pre_vec else None     # (1, 1, C)   added BEFORE GN
    post_vec_ref = next(it) if has_post_vec else None   # (1, 1, cout) added AFTER conv
    sc_ref = next(it) if sc_mode == 2 else None         # (1, H*W, Csc) external shortcut
    if has_sc_w:
        scw_ref = next(it)                    # (Csc, cout) bf16
        scb_ref = next(it)                    # (1, cout)
    o_ref = next(it)                          # (1, H*W, cout)
    pad_ref = next(it)                        # VMEM scratch (H+2, W+2, C) f32

    x = x_ref[0].astype(jnp.float32)          # (H, W, C)
    if has_pre_vec:
        x = x + pre_vec_ref[0]                # broadcast (1, C) -> time embedding add

    if apply_gn:
        m = m_ref[...]
        col = jnp.sum(jnp.sum(x, axis=0), axis=0, keepdims=True)        # (1, C)
        col2 = jnp.sum(jnp.sum(x * x, axis=0), axis=0, keepdims=True)   # (1, C)
        s = jnp.dot(col, m, preferred_element_type=jnp.float32)         # (1, G)
        ss = jnp.dot(col2, m, preferred_element_type=jnp.float32)
        mean = s * inv_count
        var = jnp.maximum(ss * inv_count - mean * mean, 0.0)
        inv_std = lax.rsqrt(var + eps)
        mean_c = jnp.dot(mean, m.T, preferred_element_type=jnp.float32).reshape(1, 1, C)
        istd_c = jnp.dot(inv_std, m.T, preferred_element_type=jnp.float32).reshape(1, 1, C)
        y = ((x - mean_c) * istd_c * gamma_ref[...].reshape(1, 1, C)
             + beta_ref[...].reshape(1, 1, C))
    else:
        y = x
    if apply_swish:
        y = y * jax.nn.sigmoid(y)

    # zero-pad the activation into the VMEM scratch (the conv pads with zeros)
    pad_ref[...] = jnp.zeros((H + 2, W + 2, C), jnp.float32)
    pad_ref[1:H + 1, 1:W + 1, :] = y

    # shortcut / residual operand
    if sc_mode == 1:                          # shortcut(enhanced) - down/up blocks
        sc_full = x.reshape(H * W, C)
        if has_sc_w:
            sc_full = (jnp.dot(sc_full.astype(jnp.bfloat16), scw_ref[...],
                               preferred_element_type=jnp.float32) + scb_ref[...])
    elif sc_mode == 2:                        # shortcut(block input x) - residual blocks
        if has_sc_w:
            sc_full = (jnp.dot(sc_ref[0], scw_ref[...],
                               preferred_element_type=jnp.float32) + scb_ref[...])
        else:
            sc_full = sc_ref[0].astype(jnp.float32)

    bias = b_ref[...]
    for h0 in range(0, H, hchunk):            # row-tiled accumulation (acc <= ~64 KiB)
        rows = hchunk * W
        r0 = h0 * W
        acc = jnp.zeros((rows, cout), jnp.float32)
        for dy in range(3):                   # in-kernel im2col: 9 shifted VMEM taps
            for dx in range(3):
                patch = pad_ref[h0 + dy:h0 + dy + hchunk, dx:dx + W, :]
                acc = acc + jnp.dot(patch.reshape(rows, C).astype(jnp.bfloat16),
                                    w_ref[dy * 3 + dx],
                                    preferred_element_type=jnp.float32)
        acc = acc + bias
        if has_post_vec:
            acc = acc + post_vec_ref[0]       # per-batch time-embedding broadcast add
        if sc_mode:
            acc = acc + sc_full[r0:r0 + rows, :]
        o_ref[0, r0:r0 + rows, :] = acc.astype(o_ref.dtype)


def gn_conv3x3(x, gn, conv, *, apply_gn=True, swish=True,
               pre_vec=None, post_vec=None,
               shortcut=None, shortcut_from_self=False, sc_conv=None,
               groups=32, eps=1e-5, out_dtype=ACT_DTYPE):
    """Fused (optional pre-add) -> GroupNorm(+Swish) -> 3x3 conv (pad=1) -> fused epilogue.

    shortcut:             external tensor added to the conv output (optionally via sc_conv 1x1)
    shortcut_from_self:   add shortcut computed from the (pre-GN, post pre_vec) kernel input
    """
    B, H, W, C = x.shape
    cout = conv['w'].shape[-1]

    inputs = [x.astype(ACT_DTYPE)]
    in_specs = [pl.BlockSpec((1, H, W, C), lambda n: (n, 0, 0, 0))]
    if apply_gn:
        inputs += [_group_onehot(C, groups),
                   gn['gamma'].reshape(1, C), gn['beta'].reshape(1, C)]
        in_specs += [pl.BlockSpec((C, groups), lambda n: (0, 0)),
                     pl.BlockSpec((1, C), lambda n: (0, 0)),
                     pl.BlockSpec((1, C), lambda n: (0, 0))]
    inputs += [conv['w'], conv['b'].reshape(1, cout).astype(jnp.float32)]
    in_specs += [pl.BlockSpec((9, C, cout), lambda n: (0, 0, 0)),
                 pl.BlockSpec((1, cout), lambda n: (0, 0))]

    has_pre = pre_vec is not None
    if has_pre:
        inputs.append(pre_vec.astype(jnp.float32).reshape(B, 1, C))
        in_specs.append(pl.BlockSpec((1, 1, C), lambda n: (n, 0, 0)))
    has_post = post_vec is not None
    if has_post:
        inputs.append(post_vec.astype(jnp.float32).reshape(B, 1, cout))
        in_specs.append(pl.BlockSpec((1, 1, cout), lambda n: (n, 0, 0)))

    if shortcut_from_self:
        sc_mode, csc = 1, C
    elif shortcut is not None:
        sc_mode, csc = 2, shortcut.shape[-1]
        inputs.append(shortcut.astype(ACT_DTYPE).reshape(B, H * W, csc))
        in_specs.append(pl.BlockSpec((1, H * W, csc), lambda n: (n, 0, 0)))
    else:
        sc_mode, csc = 0, 0
    has_sc_w = sc_conv is not None
    if has_sc_w:
        inputs += [sc_conv['w'].astype(jnp.bfloat16),
                   sc_conv['b'].reshape(1, cout).astype(jnp.float32)]
        in_specs += [pl.BlockSpec((csc, cout), lambda n: (0, 0)),
                     pl.BlockSpec((1, cout), lambda n: (0, 0))]

    hchunk = _pick_hchunk(H, W, cout)
    cg = C // groups if apply_gn else 1
    kern = partial(_gn_conv3x3_kernel, H=H, W=W, C=C, cout=cout, hchunk=hchunk,
                   inv_count=1.0 / (H * W * cg), eps=eps,
                   apply_gn=apply_gn, apply_swish=swish,
                   has_pre_vec=has_pre, has_post_vec=has_post,
                   sc_mode=sc_mode, has_sc_w=has_sc_w)
    out = pl.pallas_call(
        kern,
        out_shape=jax.ShapeDtypeStruct((B, H * W, cout), out_dtype),
        grid=(B,),
        in_specs=in_specs,
        out_specs=pl.BlockSpec((1, H * W, cout), lambda n: (n, 0, 0)),
        scratch_shapes=[pltpu.VMEM((H + 2, W + 2, C), jnp.float32)],
        compiler_params=_PARALLEL_1D,
    )(*inputs)
    return out.reshape(B, H, W, cout)


# ----------------------------------------------------------------------------
# Fully-fused TransformerBlock kernel (one pallas_call per block)
#   GN -> 1x1 conv -> self-attn (+BN scale, +res) -> cross-attn (+BN scale, +res)
#   -> linear -> (x + BN(x)) -> 1x1 conv, all per batch element, lane-dense output.
# ----------------------------------------------------------------------------

def _transformer_kernel(x_ref, m_ref, gamma_ref, beta_ref,
                        w1_ref, b1_ref, wqkv_ref, wos_ref,
                        slots_ref, sbias_ref, wqc_ref, wkvc_ref, woc_ref,
                        wlin_ref, blin_ref, wc2_ref, bc2_ref, o_ref, *,
                        C, heads, hd, inv_count, eps, bn_scale):
    x = x_ref[0].astype(jnp.float32)                               # (L, C)
    y = _gn_normalize_2d(x, m_ref[...], gamma_ref[...], beta_ref[...], inv_count, eps)
    x1 = (jnp.dot(y.astype(jnp.bfloat16), w1_ref[...],
                  preferred_element_type=jnp.float32) + b1_ref[...])   # 1x1 conv, (L, C)

    scale = 1.0 / math.sqrt(hd)

    # ---- self-attention (per-head unrolled, 2D MXU matmuls only) ----
    qkv = jnp.dot(x1.astype(jnp.bfloat16), wqkv_ref[...],
                  preferred_element_type=jnp.float32)              # (L, 3C)
    attn = jnp.zeros_like(x1)
    for h in range(heads):
        q = qkv[:, h * hd:(h + 1) * hd].astype(jnp.bfloat16)
        k = qkv[:, C + h * hd:C + (h + 1) * hd].astype(jnp.bfloat16)
        v = qkv[:, 2 * C + h * hd:2 * C + (h + 1) * hd].astype(jnp.bfloat16)
        s = lax.dot_general(q, k, (((1,), (1,)), ((), ())),
                            preferred_element_type=jnp.float32) * scale
        s = s - jnp.max(s, axis=-1, keepdims=True)
        p = jnp.exp(s)
        p = p * pl.reciprocal(jnp.sum(p, axis=-1, keepdims=True), approx=True)
        oh = jnp.dot(p.astype(jnp.bfloat16), v, preferred_element_type=jnp.float32)
        attn = attn + jnp.dot(oh.astype(jnp.bfloat16), wos_ref[h * hd:(h + 1) * hd, :],
                              preferred_element_type=jnp.float32)
    x2 = attn * bn_scale + x1                                      # BN(eval) + residual

    # ---- cross-attention over (padded, masked) slots ----
    qc = jnp.dot(x2.astype(jnp.bfloat16), wqc_ref[...],
                 preferred_element_type=jnp.float32)               # (L, C)
    kv = jnp.dot(slots_ref[0], wkvc_ref[...],
                 preferred_element_type=jnp.float32)               # (Lk, 2C)
    sbias = sbias_ref[...]                                         # (1, Lk) 0 / -1e9 mask
    attn2 = jnp.zeros_like(x1)
    for h in range(heads):
        q = qc[:, h * hd:(h + 1) * hd].astype(jnp.bfloat16)
        k = kv[:, h * hd:(h + 1) * hd].astype(jnp.bfloat16)
        v = kv[:, C + h * hd:C + (h + 1) * hd].astype(jnp.bfloat16)
        s = lax.dot_general(q, k, (((1,), (1,)), ((), ())),
                            preferred_element_type=jnp.float32) * scale + sbias
        s = s - jnp.max(s, axis=-1, keepdims=True)
        p = jnp.exp(s)
        p = p * pl.reciprocal(jnp.sum(p, axis=-1, keepdims=True), approx=True)
        oh = jnp.dot(p.astype(jnp.bfloat16), v, preferred_element_type=jnp.float32)
        attn2 = attn2 + jnp.dot(oh.astype(jnp.bfloat16), woc_ref[h * hd:(h + 1) * hd, :],
                                preferred_element_type=jnp.float32)
    x3 = attn2 * bn_scale + x2

    x3 = (jnp.dot(x3.astype(jnp.bfloat16), wlin_ref[...],
                  preferred_element_type=jnp.float32) + blin_ref[...])
    x4 = x3 * (1.0 + bn_scale)                                     # x3 + BN(x3) (eval)
    out = (jnp.dot(x4.astype(jnp.bfloat16), wc2_ref[...],
                   preferred_element_type=jnp.float32) + bc2_ref[...])
    o_ref[0] = out.astype(o_ref.dtype)


def transformer_block(p, x, slots_padded, slot_bias, head_num, groups=32, eps=1e-5):
    B, H, W, C = x.shape
    L = H * W
    cout = p['linear']['w'].shape[-1]
    Lk, dk = slots_padded.shape[1], slots_padded.shape[2]
    x3d = x.astype(ACT_DTYPE).reshape(B, L, C)
    m = _group_onehot(C, groups)
    kern = partial(_transformer_kernel, C=C, heads=head_num, hd=C // head_num,
                   inv_count=1.0 / (L * (C // groups)), eps=eps, bn_scale=BN_EVAL_SCALE)
    out = pl.pallas_call(
        kern,
        out_shape=jax.ShapeDtypeStruct((B, L, cout), ACT_DTYPE),
        grid=(B,),
        in_specs=[pl.BlockSpec((1, L, C), lambda n: (n, 0, 0)),
                  pl.BlockSpec((C, groups), lambda n: (0, 0)),
                  pl.BlockSpec((1, C), lambda n: (0, 0)),
                  pl.BlockSpec((1, C), lambda n: (0, 0)),
                  pl.BlockSpec((C, C), lambda n: (0, 0)),         # conv1 w
                  pl.BlockSpec((1, C), lambda n: (0, 0)),         # conv1 b
                  pl.BlockSpec((C, 3 * C), lambda n: (0, 0)),     # self wqkv
                  pl.BlockSpec((C, C), lambda n: (0, 0)),         # self wo
                  pl.BlockSpec((1, Lk, dk), lambda n: (n, 0, 0)),  # slots (padded)
                  pl.BlockSpec((1, Lk), lambda n: (0, 0)),        # slot mask bias
                  pl.BlockSpec((C, C), lambda n: (0, 0)),         # cross wq
                  pl.BlockSpec((dk, 2 * C), lambda n: (0, 0)),    # cross wkv
                  pl.BlockSpec((C, C), lambda n: (0, 0)),         # cross wo
                  pl.BlockSpec((C, cout), lambda n: (0, 0)),      # linear w
                  pl.BlockSpec((1, cout), lambda n: (0, 0)),      # linear b
                  pl.BlockSpec((cout, cout), lambda n: (0, 0)),   # conv2 w
                  pl.BlockSpec((1, cout), lambda n: (0, 0))],     # conv2 b
        out_specs=pl.BlockSpec((1, L, cout), lambda n: (n, 0, 0)),
        compiler_params=_PARALLEL_1D,
    )(x3d, m, p['gn1']['gamma'].reshape(1, C), p['gn1']['beta'].reshape(1, C),
      p['conv1']['w'], p['conv1']['b'].reshape(1, C).astype(jnp.float32),
      p['self_attn']['wqkv'], p['self_attn']['wo'],
      slots_padded, slot_bias,
      p['cross_attn']['wq'], p['cross_attn']['wkv'], p['cross_attn']['wo'],
      p['linear']['w'], p['linear']['b'].reshape(1, cout).astype(jnp.float32),
      p['conv2']['w'], p['conv2']['b'].reshape(1, cout).astype(jnp.float32))
    return out.reshape(B, H, W, cout)


# ----------------------------------------------------------------------------
# JAX glue ops (tiny; kept outside Pallas)
# ----------------------------------------------------------------------------

def swish(x):
    return x * jax.nn.sigmoid(x)


def avg_pool_3x3_s2(x):
    """AvgPool2d(kernel=3, stride=2, padding=1), count_include_pad=True (PyTorch default)."""
    B, H, W, C = x.shape
    Ho, Wo = (H + 2 - 3) // 2 + 1, (W + 2 - 3) // 2 + 1
    xp = jnp.pad(x.astype(jnp.float32), ((0, 0), (1, 1), (1, 1), (0, 0)))
    acc = jnp.zeros((B, Ho, Wo, C), jnp.float32)
    for dy in range(3):
        for dx in range(3):
            acc = acc + xp[:, dy:dy + 2 * Ho - 1:2, dx:dx + 2 * Wo - 1:2, :]
    return (acc / 9.0).astype(ACT_DTYPE)


def upsample_nearest2x(x):
    return jnp.repeat(jnp.repeat(x, 2, axis=1), 2, axis=2)


# ----------------------------------------------------------------------------
# Blocks (1-2 pallas_calls each)
# ----------------------------------------------------------------------------

def res_block(p, x, temb_vec):
    # h = conv1(swish(GN1(x))) + temb   (temb add fused as conv epilogue)
    h = gn_conv3x3(x, p['gn1'], p['conv1'], swish=True, post_vec=temb_vec)
    # out = conv2(swish(GN2(h))) + shortcut(x)   (1x1 shortcut fused into the conv epilogue)
    return gn_conv3x3(h, p['gn2'], p['conv2'], swish=True,
                      shortcut=x, sc_conv=p.get('short'))


def down_block(p, x, temb_vec):
    h = avg_pool_3x3_s2(group_norm(x, p['gn1'], swish=True))
    # enhanced = h + temb is formed in-kernel (pre_vec); shortcut(enhanced) fused too
    return gn_conv3x3(h, p['gn2'], p['conv'], swish=True,
                      pre_vec=temb_vec, shortcut_from_self=True, sc_conv=p.get('short'))


def up_block(p, x, temb_vec):
    h = group_norm(upsample_nearest2x(x), p['gn1'], swish=True)
    return gn_conv3x3(h, p['gn2'], p['conv'], swish=True,
                      pre_vec=temb_vec, shortcut_from_self=True, sc_conv=p.get('short'))


def time_embedding(p, t_tensor, num_features=64):
    emb_size = num_features // 8
    scale = math.log(10000.0) / (emb_size - 1)
    pos = jnp.exp(jnp.arange(emb_size, dtype=jnp.float32) * -scale)
    te = t_tensor[:, None].astype(jnp.float32) * pos[None, :]
    sin_emb = jnp.concatenate([jnp.sin(te), jnp.cos(te)], axis=1)   # (B, 16)
    h = pallas_matmul(sin_emb, p['l1']['w'], p['l1']['b'])
    h = swish(h)
    return pallas_matmul(h, p['l2']['w'], p['l2']['b'])


# ----------------------------------------------------------------------------
# Unet
# ----------------------------------------------------------------------------

DOWN_CFG = [
    ('r1', 'res', 64, 64), ('r2', 'res', 64, 64), ('d1', 'down', 64, 64),
    ('r3', 'res', 64, 128), ('t1', 'trans', 128, 128), ('r4', 'res', 128, 128),
    ('t2', 'trans', 128, 128), ('d2', 'down', 128, 128), ('r5', 'res', 128, 192),
    ('t3', 'trans', 192, 192), ('r6', 'res', 192, 192), ('t4', 'trans', 192, 192),
    ('d3', 'down', 192, 192), ('r7', 'res', 192, 256), ('t5', 'trans', 256, 256),
    ('r8', 'res', 256, 256), ('t6', 'trans', 256, 256), ('r9', 'res', 256, 256),
    ('t7', 'trans', 256, 256), ('r10', 'res', 256, 256),
]

UP_CFG = [
    ('r11', 'res', 512, 256), ('t8', 'trans', 256, 256), ('r12', 'res', 512, 256),
    ('t9', 'trans', 256, 256), ('r13', 'res', 448, 256), ('t10', 'trans', 256, 256),
    ('u1', 'up', 256, 256), ('r14', 'res', 448, 192), ('t11', 'trans', 192, 192),
    ('r15', 'res', 384, 192), ('t12', 'trans', 192, 192), ('r16', 'res', 320, 192),
    ('t13', 'trans', 192, 192), ('u2', 'up', 192, 192), ('r17', 'res', 320, 128),
    ('t14', 'trans', 128, 128), ('r18', 'res', 256, 128), ('t15', 'trans', 128, 128),
    ('r19', 'res', 192, 128), ('t16', 'trans', 128, 128), ('u3', 'up', 128, 128),
    ('r20', 'res', 192, 64), ('r21', 'res', 128, 64), ('r22', 'res', 128, 64),
]

OUT_KEYS = ['conv_in', 'r1', 'r2', 'd1', 't1', 't2', 'd2', 't3', 't4', 'd3', 't5', 't6']
MAP_DICT = {'r22': 'conv_in', 'r21': 'r1', 'r20': 'r2', 'r19': 'd1', 'r18': 't1',
            'r17': 't2', 'r16': 'd2', 'r15': 't3', 'r14': 't4', 'r13': 'd3',
            'r12': 't5', 'r11': 't6'}


def unet_forward(p, z_nchw, temb, slots):
    B = z_nchw.shape[0]
    x = jnp.transpose(z_nchw, (0, 2, 3, 1)).astype(ACT_DTYPE)        # NCHW -> NHWC

    # slots padded once (11 -> 16) + in-kernel softmax mask bias
    S = slots.shape[1]
    slots_p = jnp.pad(slots.astype(jnp.float32),
                      ((0, 0), (0, SLOT_PAD - S), (0, 0))).astype(ACT_DTYPE)
    slot_bias = jnp.where(jnp.arange(SLOT_PAD) < S, 0.0, -1e9)
    slot_bias = slot_bias.reshape(1, SLOT_PAD).astype(jnp.float32)

    # all per-block time-embedding projections in ONE batched matmul
    tc = p['time_cat']
    tproj = pallas_matmul(swish(temb), tc['w'], tc['b'])             # (B, total)

    def tslice(section, name):
        off, width = tc['offsets'][(section, name)]
        return tproj[:, off:off + width]

    x = gn_conv3x3(x, None, p['conv_in'], apply_gn=False, swish=False)
    outs = {'conv_in': x}
    for key, kind, cin, cout in DOWN_CFG:
        blk = p['down'][key]
        if kind == 'res':
            x = res_block(blk, x, tslice('down', key))
        elif kind == 'down':
            x = down_block(blk, x, tslice('down', key))
        else:
            x = transformer_block(blk, x, slots_p, slot_bias, cin // 32)
        if key in OUT_KEYS:
            outs[key] = x
    for key, kind, cin, cout in UP_CFG:
        if key in MAP_DICT:
            x = jnp.concatenate([x, outs[MAP_DICT[key]]], axis=-1)   # torch.cat dim=1
        blk = p['up'][key]
        if kind == 'res':
            x = res_block(blk, x, tslice('up', key))
        elif kind == 'up':
            x = up_block(blk, x, tslice('up', key))
        else:
            x = transformer_block(blk, x, slots_p, slot_bias, cin // 32)
    x = gn_conv3x3(x, p['gn_out'], p['conv_op'], apply_gn=True, swish=False,
                   out_dtype=jnp.float32)
    return jnp.transpose(x, (0, 3, 1, 2))                            # NHWC -> NCHW


# ----------------------------------------------------------------------------
# Deterministic parameter init (matmul weights stored in bf16 for the MXU)
# ----------------------------------------------------------------------------

def _uniform(key, shape, bound):
    return jax.random.uniform(key, shape, jnp.float32, -bound, bound)


def init_linear(key, fin, fout, bias=True):
    k1, k2 = jax.random.split(key)
    b = 1.0 / math.sqrt(fin)
    p = {'w': _uniform(k1, (fin, fout), b).astype(jnp.bfloat16)}
    if bias:
        p['b'] = _uniform(k2, (fout,), b)
    return p


def init_conv(key, cin, cout, k):
    k1, k2 = jax.random.split(key)
    b = 1.0 / math.sqrt(cin * k * k)
    w = _uniform(k1, (k * k, cin, cout), b).astype(jnp.bfloat16)
    if k == 1:
        w = w.reshape(cin, cout)
    return {'w': w, 'b': _uniform(k2, (cout,), b)}


def init_gn(c):
    return {'gamma': jnp.ones((c,), jnp.float32), 'beta': jnp.zeros((c,), jnp.float32)}


def init_res(key, cin, cout, ctime=64):
    ks = jax.random.split(key, 4)
    p = {'gn1': init_gn(cin), 'conv1': init_conv(ks[0], cin, cout, 3),
         'gn2': init_gn(cout), 'conv2': init_conv(ks[1], cout, cout, 3),
         'time': init_linear(ks[2], ctime, cout)}
    if cin != cout:
        p['short'] = init_conv(ks[3], cin, cout, 1)
    return p


def init_downup(key, cin, cout, ctime=64):
    ks = jax.random.split(key, 3)
    p = {'gn1': init_gn(cin), 'gn2': init_gn(cin),
         'conv': init_conv(ks[0], cin, cout, 3),
         'time': init_linear(ks[1], ctime, cin)}
    if cin != cout:
        p['short'] = init_conv(ks[2], cin, cout, 1)
    return p


def init_mha(key, in_features, head_num, d_k):
    ks = jax.random.split(key, 4)
    F = in_features
    hd = F // head_num
    wq = _uniform(ks[0], (F, head_num * hd), 1.0 / math.sqrt(F))
    wk = _uniform(ks[1], (d_k, head_num * hd), 1.0 / math.sqrt(d_k))
    wv = _uniform(ks[2], (d_k, head_num * hd), 1.0 / math.sqrt(d_k))
    wo = _uniform(ks[3], (head_num * hd, F), 1.0 / math.sqrt(head_num * hd))
    p = {'wo': wo.astype(jnp.bfloat16)}
    if d_k == F:   # self-attention: fuse q/k/v into one concatenated weight
        p['wqkv'] = jnp.concatenate([wq, wk, wv], axis=1).astype(jnp.bfloat16)
    else:          # cross-attention: fuse k/v
        p['wq'] = wq.astype(jnp.bfloat16)
        p['wkv'] = jnp.concatenate([wk, wv], axis=1).astype(jnp.bfloat16)
    return p


def init_trans(key, cin, cout, embed, heads):
    ks = jax.random.split(key, 5)
    return {'gn1': init_gn(cin), 'conv1': init_conv(ks[0], cin, cin, 1),
            'self_attn': init_mha(ks[1], embed, heads, embed),
            'cross_attn': init_mha(ks[2], embed, heads, 64),   # d_k=64 default
            'linear': init_linear(ks[3], cin, cout),
            'conv2': init_conv(ks[4], cout, cout, 1)}


def init_unet(key):
    ks = jax.random.split(key, 2 + len(DOWN_CFG) + len(UP_CFG))
    p = {'conv_in': init_conv(ks[0], 3, 64, 3),
         'gn_out': init_gn(64),
         'conv_op': init_conv(ks[1], 64, 3, 3),
         'down': {}, 'up': {}}
    i = 2
    for name, kind, cin, cout in DOWN_CFG:
        if kind == 'res':
            p['down'][name] = init_res(ks[i], cin, cout)
        elif kind == 'down':
            p['down'][name] = init_downup(ks[i], cin, cout)
        else:
            p['down'][name] = init_trans(ks[i], cin, cout, cin, cin // 32)
        i += 1
    for name, kind, cin, cout in UP_CFG:
        if kind == 'res':
            p['up'][name] = init_res(ks[i], cin, cout)
        elif kind == 'up':
            p['up'][name] = init_downup(ks[i], cin, cout)
        else:
            p['up'][name] = init_trans(ks[i], cin, cout, cin, cin // 32)
        i += 1

    # concatenate all per-block time-embedding projection weights into one matmul
    ws, bs, offsets, off = [], [], {}, 0
    for section, cfg in (('down', DOWN_CFG), ('up', UP_CFG)):
        for name, kind, cin, cout in cfg:
            if kind == 'trans':
                continue
            tp = p[section][name]['time']
            width = tp['w'].shape[1]
            offsets[(section, name)] = (off, width)
            ws.append(tp['w'])
            bs.append(tp['b'])
            off += width
    p['time_cat'] = {'w': jnp.concatenate(ws, axis=1),
                     'b': jnp.concatenate(bs, axis=0),
                     'offsets': offsets}
    return p


def init_time_embedding(key, num_features=64):
    k1, k2 = jax.random.split(key)
    return {'l1': init_linear(k1, num_features // 4, num_features),
            'l2': init_linear(k2, num_features, num_features)}


# ----------------------------------------------------------------------------
# DiffusionModel forward
# ----------------------------------------------------------------------------

def diffusion_forward(params, z, slots, t, t_tensor, noise_key):
    """z: (B,3,H,W) NCHW latent (VAE.encode stand-in), slots: (B,S,64), t: int timestep."""
    betas = jnp.linspace(0.0015, 0.0195, 1000)
    alphas_cumprod = jnp.cumprod(1.0 - betas)
    sqrt_acp = jnp.sqrt(alphas_cumprod)
    sqrt_1m_acp = jnp.sqrt(1.0 - alphas_cumprod)
    noise = jax.random.normal(noise_key, z.shape, jnp.float32)
    zt = z * sqrt_acp[t] + noise * sqrt_1m_acp[t]
    temb = time_embedding(params['time_emb'], t_tensor)
    out = unet_forward(params['unet'], zt, temb, slots)
    return out, noise


if __name__ == "__main__":
    root = jax.random.PRNGKey(0)
    k_param, k_temb, k_z, k_slots, k_noise = jax.random.split(root, 5)

    params = {'unet': init_unet(k_param),
              'time_emb': init_time_embedding(k_temb)}

    B, H, W = 2, 16, 16
    z = jax.random.normal(k_z, (B, 3, H, W), jnp.float32)          # latent (VAE stand-in)
    slots = jax.random.normal(k_slots, (B, 11, 64), jnp.float32)   # slot features (d_k=64)
    t = 10
    t_tensor = jnp.array([10.0, 500.0], jnp.float32)

    out, noise = diffusion_forward(params, z, slots, t, t_tensor, k_noise)
    out = jax.block_until_ready(out)
    noise = jax.block_until_ready(noise)

    assert out.shape == (B, 3, H, W) and noise.shape == (B, 3, H, W)
    assert bool(jnp.all(jnp.isfinite(out)))
    print("KERNEL_OK")
</pallas_src>

<mosaic_0001>
module attributes {stable_mosaic.version = 11 : i64} {
  func.func @_matmul_bias_kernel(%arg0: i32, %arg1: memref<2x16xf32, #tpu.memory_space<vmem>>, %arg2: memref<16x64xbf16, #tpu.memory_space<vmem>>, %arg3: memref<1x64xf32, #tpu.memory_space<vmem>>, %arg4: memref<2x64xf32, #tpu.memory_space<vmem>>) attributes {dimension_semantics = [#tpu.dimension_semantics<parallel>], iteration_bounds = array<i64: 1>, scalar_prefetch = 0 : i64, scratch_operands = 0 : i64, tpu.core_type = #tpu.core_type<tc>, window_params = [{pipeline_mode = #tpu.pipeline_mode<synchronous>, transform_indices = @transform_0, window_bounds = array<i64: 2, 16>}, {pipeline_mode = #tpu.pipeline_mode<synchronous>, transform_indices = @transform_1, window_bounds = array<i64: 16, 64>}, {pipeline_mode = #tpu.pipeline_mode<synchronous>, transform_indices = @transform_2, window_bounds = array<i64: 1, 64>}, {pipeline_mode = #tpu.pipeline_mode<synchronous>, transform_indices = @transform_3, window_bounds = array<i64: 2, 64>}]} {
    %c0 = arith.constant 0 : index
    %c0_0 = arith.constant 0 : index
    %0 = vector.load %arg1[%c0, %c0_0] : memref<2x16xf32, #tpu.memory_space<vmem>>, vector<2x16xf32>
    %1 = arith.truncf %0 : vector<2x16xf32> to vector<2x16xbf16>
    %c0_1 = arith.constant 0 : index
    %c0_2 = arith.constant 0 : index
    %2 = vector.load %arg2[%c0_1, %c0_2] : memref<16x64xbf16, #tpu.memory_space<vmem>>, vector<16x64xbf16>
    %cst = arith.constant dense<0.000000e+00> : vector<2x64xf32>
    %3 = tpu.matmul %1, %2, %cst {dimension_numbers = #tpu.dot_dimension_numbers<[1], [0], [0], [1], [0, 0, 1, 1], [], []>} : vector<2x16xbf16>, vector<16x64xbf16>, vector<2x64xf32> -> vector<2x64xf32>
    %c0_3 = arith.constant 0 : index
    %c0_4 = arith.constant 0 : index
    %4 = vector.load %arg3[%c0_3, %c0_4] : memref<1x64xf32, #tpu.memory_space<vmem>>, vector<1x64xf32>
    %5 = vector.broadcast %4 : vector<1x64xf32> to vector<2x64xf32>
    %6 = arith.addf %3, %5 : vector<2x64xf32>
    %c0_5 = arith.constant 0 : index
    %c0_6 = arith.constant 0 : index
    %7 = vector.load %arg4[%c0_5, %c0_6] : memref<2x64xf32, #tpu.memory_space<vmem>>, vector<2x64xf32>
    tpu.vector_store %arg4[%c0_5, %c0_6], %6 {strides = array<i32>} : memref<2x64xf32, #tpu.memory_space<vmem>>, vector<2x64xf32>,
    return
  }
  func.func @transform_0(%arg0: i32) -> (i32, i32) {
    %c0_i32 = arith.constant 0 : i32
    %c0_i32_0 = arith.constant 0 : i32
    %c0_i32_1 = arith.constant 0 : i32
    return %c0_i32, %c0_i32_0 : i32, i32
  }
  func.func @transform_1(%arg0: i32) -> (i32, i32) {
    %c0_i32 = arith.constant 0 : i32
    %c0_i32_0 = arith.constant 0 : i32
    %c0_i32_1 = arith.constant 0 : i32
    return %c0_i32, %c0_i32_0 : i32, i32
  }
  func.func @transform_2(%arg0: i32) -> (i32, i32) {
    %c0_i32 = arith.constant 0 : i32
    %c0_i32_0 = arith.constant 0 : i32
    %c0_i32_1 = arith.constant 0 : i32
    return %c0_i32, %c0_i32_0 : i32, i32
  }
  func.func @transform_3(%arg0: i32) -> (i32, i32) {
    %c0_i32 = arith.constant 0 : i32
    %c0_i32_0 = arith.constant 0 : i32
    %c0_i32_1 = arith.constant 0 : i32
    return %c0_i32, %c0_i32_0 : i32, i32
  }
}

</mosaic_0001>

<llo_original>
// kernel: tpu_custom_call.1
$region0: #{tpu_custom_call.1}
  #allocation0 [shape = 'u32[]', space=smem, size = 0x4, offset = 0x4, fixed_abs, tag = 'smem constant byte address 0x4 - core index']
  #allocation1 [shape = 'u32[144,128]{1,0:T(1,128)}', space=vmem, size = 0x12000, scoped, tag = 'internal scratch']
  %s0 = inlined_call_operand.hbm [shape: f32[2,16], index: 0, kind: input, shape index: {}]
  %s1 = inlined_call_operand.hbm [shape: bf16[16,64], index: 1, kind: input, shape index: {}]
  %s2 = inlined_call_operand.vmem [shape: f32[1,64], index: 2, kind: input, shape index: {}]
  %s3 = inlined_call_operand.hbm [shape: f32[2,64], index: 3, kind: output, shape index: {}]
  %s4 = sld [smem:[#allocation0]]
  $region30: #{tpu_custom_call.1} parent=0
    _
  %s6 = ssub.s32 1, %s4
  %s7 = scalar_select 0, %s6, %s4
  $region1: #{tpu_custom_call.1} parent=0
    #allocation2 [shape = 'u8[1024]{0}', space=vmem, size = 0x400, scoped, tag = 'input window, operand 0, single buffered']
    #allocation3 [shape = 's32[1]{0}', space=sflag, size = 0x4, scoped, tag = 'scoped memory for tpu_custom_call.1']
    #allocation4 [shape = 's32[1]{0}', space=sflag, size = 0x4, scoped, tag = 'scoped memory for tpu_custom_call.1']
    #allocation5 [shape = 'u8[4096]{0}', space=vmem, size = 0x1000, scoped, tag = 'input window, operand 1, single buffered']
    #allocation6 [shape = 's32[1]{0}', space=sflag, size = 0x4, scoped, tag = 'scoped memory for tpu_custom_call.1']
    #allocation7 [shape = 'u8[1024]{0}', space=vmem, size = 0x400, scoped, tag = 'output window, operand 0, single buffered']
    %8 = vsyncpa [#allocation3], 0
    %9 = vsyncpa [#allocation6], 0
    %10 = vsyncpa [#allocation4], 0
    // Predicated region
    $region2: #{tpu_custom_call.1} parent=1 // pred_check
      _
    $region3: #{tpu_custom_call.1} parent=1 // pred_check_branch
      %12 = sbr.rel (0) target = $region5
    $region4: #{tpu_custom_call.1} parent=1 // pred_region
      %s14 = ssub.s32 32, 32
      %15 = vsyncadd [#allocation3], %s14
      %s17 = sshll.u32 [#allocation2], 4
      %s18 = int_to_ptr.vmem [resolvable:$true] %s17
      %20 = dma.hbm_to_vmem [thread:$0]  %s0, 32, %s18, [#allocation3]
    $region5: #{tpu_custom_call.1} parent=1 // pred_fallthru
      _
    // Predicated region
    $region6: #{tpu_custom_call.1} parent=1 // pred_check
      _
    $region7: #{tpu_custom_call.1} parent=1 // pred_check_branch
      %22 = sbr.rel (0) target = $region9
    $region8: #{tpu_custom_call.1} parent=1 // pred_region
      %s24 = ssub.s32 128, 128
      %25 = vsyncadd [#allocation6], %s24
      %s26 = sshll.u32 [#allocation5], 4
      %s27 = int_to_ptr.vmem [resolvable:$true] %s26
      %32 = dma.hbm_to_vmem [thread:$0]  %s1, 128, %s27, [#allocation6], 64, 64, 4
    $region9: #{tpu_custom_call.1} parent=1 // pred_fallthru
      _
    // Predicated region
    $region10: #{tpu_custom_call.1} parent=1 // pred_check
      _
    $region11: #{tpu_custom_call.1} parent=1 // pred_check_branch
      %34 = sbr.rel (0) target = $region13
    $region12: #{tpu_custom_call.1} parent=1 // pred_region
      _
    $region13: #{tpu_custom_call.1} parent=1 // pred_fallthru
      _
    // Predicated region
    $region14: #{tpu_custom_call.1} parent=1 // pred_check
      _
    $region15: #{tpu_custom_call.1} parent=1 // pred_check_branch
      %36 = sbr.rel (0) target = $region17
    $region16: #{tpu_custom_call.1} parent=1 // pred_region
      %37 = dma.done [#allocation3], 32
    $region17: #{tpu_custom_call.1} parent=1 // pred_fallthru
      _
    // Predicated region
    $region18: #{tpu_custom_call.1} parent=1 // pred_check
      _
    $region19: #{tpu_custom_call.1} parent=1 // pred_check_branch
      %39 = sbr.rel (0) target = $region21
    $region20: #{tpu_custom_call.1} parent=1 // pred_region
      %40 = dma.done [#allocation6], 128
    $region21: #{tpu_custom_call.1} parent=1 // pred_fallthru
      _
    %v42 = vld [vmem:[#allocation2] sm:$0x3]
    %v43 = vpack.c.bf16 %v42, %v42
    %v44 = vld [vmem:[#allocation5] sm:$0xf]
    %v45 = vld [vmem:[#allocation5 + $0x4] sm:$0xf]
    %v46 = vld [vmem:[%s2] sm:$0x1]
    %v48 = vlaneseq
    %v49 = vshrl.u32 %v48, 7
    %v50 = vsub.s32 0, %v49
    %v51 = vrot.slane %v46, %v50
    %v55 = vunpack.c.l.b16 %v44
    %v56 = vunpack.c.l.b16 %v45
    %v57 = vpack.c.b16 %v56, %v55
    %vm59 = vcmask 130048
    %v61 = vsel %vm59, %v43, 0
    %63 = vmatprep.subr.bf16.mxu0 0
    %64 = vmatpush1.bf16.msra.mxu0 %v57
    %65 = vmatprep.subr.bf16.mxu0 0
    %66 = vmatpush1.bf16.msra.mxu0 0
    %67 = vmatprep.subr.bf16.mxu0 0
    %68 = vmatpush1.bf16.msra.mxu0 0
    %69 = vmatprep.subr.bf16.mxu0 0
    %70 = vmatpush1.bf16.msra.mxu0 0
    %71 = vmatprep.subr.bf16.mxu0 0
    %72 = vmatpush1.bf16.msra.mxu0 0
    %73 = vmatprep.subr.bf16.mxu0 0
    %74 = vmatpush1.bf16.msra.mxu0 0
    %75 = vmatprep.subr.bf16.mxu0 0
    %76 = vmatpush1.bf16.msra.mxu0 0
    %77 = vmatprep.subr.bf16.mxu0 0
    %78 = vmatpush1.bf16.msra.mxu0 0
    %79 = vmatprep.subr.bf16.mxu0 0
    %80 = vmatpush1.bf16.msra.mxu0 0
    %81 = vmatprep.subr.bf16.mxu0 0
    %82 = vmatpush1.bf16.msra.mxu0 0
    %83 = vmatprep.subr.bf16.mxu0 0
    %84 = vmatpush1.bf16.msra.mxu0 0
    %85 = vmatprep.subr.bf16.mxu0 0
    %86 = vmatpush1.bf16.msra.mxu0 0
    %87 = vmatprep.subr.bf16.mxu0 0
    %88 = vmatpush1.bf16.msra.mxu0 0
    %89 = vmatprep.subr.bf16.mxu0 0
    %90 = vmatpush1.bf16.msra.mxu0 0
    %91 = vmatprep.subr.bf16.mxu0 0
    %92 = vmatpush1.bf16.msra.mxu0 0
    %93 = vmatprep.subr.bf16.mxu0 0
    %94 = vmatpush1.bf16.msra.mxu0 0
    %95 = vmatprep.mubr.bf16.mxu0 0
    %96 = vmatmul.mubr.bf16.gmra.mrb[0].mxu0 %v61
    %v97 = vpop.f32.mrb[0].mxu0
    %v98 = vadd.f32 %v51, %v97
    %v99 = vpop.f32.mrb[0].mxu0
    %v100 = vpop.f32.mrb[0].mxu0
    %v101 = vpop.f32.mrb[0].mxu0
    %102 = vdwg.mxu0
    %vm103 = vcmask 517120
    %104 = vst.msk [vmem:[#allocation7] sm:$0x3] %vm103, %v98
    // Predicated region
    $region22: #{tpu_custom_call.1} parent=1 // pred_check
      _
    $region23: #{tpu_custom_call.1} parent=1 // pred_check_branch
      %106 = sbr.rel (0) target = $region25
    $region24: #{tpu_custom_call.1} parent=1 // pred_region
      %s108 = ssub.s32 32, 32
      %109 = vsyncadd [#allocation4], %s108
      %s111 = sshll.u32 [#allocation7], 4
      %s112 = int_to_ptr.vmem [resolvable:$true] %s111
      %114 = dma.vmem_to_hbm [thread:$0]  %s112, 32, %s3, [#allocation4]
    $region25: #{tpu_custom_call.1} parent=1 // pred_fallthru
      _
    // Predicated region
    $region26: #{tpu_custom_call.1} parent=1 // pred_check
      _
    $region27: #{tpu_custom_call.1} parent=1 // pred_check_branch
      %116 = sbr.rel (0) target = $region29
    $region28: #{tpu_custom_call.1} parent=1 // pred_region
      %117 = dma.done [#allocation4], 32
    $region29: #{tpu_custom_call.1} parent=1 // pred_fallthru
      _
    %118 = vsyncpa [#allocation3], 1
    %119 = vsyncpa [#allocation6], 1
    %120 = vsyncpa [#allocation4], 1

</llo_original>
